<compile_context>
chip_gen: v7x
topology: tpu7x:2x2x1
jax: 0.10.0
libtpu: 0.0.40
codegen_flags: <defaults>
</compile_context>

<pallas_src>
import jax
import jax.numpy as jnp
from jax.experimental import pallas as pl
from jax.experimental.pallas import tpu as pltpu


def _round_up(x, m):
    return ((x + m - 1) // m) * m


def actor_mlp_kernel(obs_ref, feat_ref,
                     w0a_ref, w0b_ref, b0_ref,
                     w1_ref, b1_ref,
                     w2_ref, b2_ref,
                     w3_ref, b3_ref,
                     out_ref):
    """Fused 4-layer MLP for one batch tile; all weights stay VMEM-resident."""
    # Inputs arrive as f32; cast to bf16 in-kernel (rides spare VPU slots
    # instead of a separate wrapper-side XLA cast pass over HBM).
    obs = obs_ref[...].astype(jnp.bfloat16)
    feat = feat_ref[...].astype(jnp.bfloat16)

    # Layer 0: (obs || feat) @ w0 computed as two MXU dots summed in f32
    # (no concat anywhere).
    x = (jnp.dot(obs, w0a_ref[...], preferred_element_type=jnp.float32)
         + jnp.dot(feat, w0b_ref[...], preferred_element_type=jnp.float32)
         + b0_ref[...])
    x = jnp.maximum(x, 0.0)

    x = jnp.dot(x.astype(jnp.bfloat16), w1_ref[...],
                preferred_element_type=jnp.float32) + b1_ref[...]
    x = jnp.maximum(x, 0.0)

    x = jnp.dot(x.astype(jnp.bfloat16), w2_ref[...],
                preferred_element_type=jnp.float32) + b2_ref[...]
    x = jnp.maximum(x, 0.0)

    x = jnp.dot(x.astype(jnp.bfloat16), w3_ref[...],
                preferred_element_type=jnp.float32) + b3_ref[...]
    x = jnp.maximum(x, 0.0)   # fc2 ends with nn.ReLU() in the reference module

    out_ref[...] = x.astype(out_ref.dtype)


def _choose_batch_tile(B, block_b):
    """Batch tile: >=16 rows (bf16 sublane packing), <= block_b, and sized so
    the grid has >=2 steps when possible (v7x has 2 TensorCores which only get
    work when the parallel grid axis length is > 1)."""
    if B <= 16:
        return 16
    half = _round_up(pl.cdiv(B, 2), 16)          # try to split into >= 2 tiles
    return min(block_b, half, _round_up(B, 16))


def actor_forward(obs, feat, params, *, block_b=512, out_dtype=jnp.bfloat16):
    """Actor.forward: flatten obs/feat and run the fused MLP Pallas kernel."""
    (w0, b0), (w1, b1), (w2, b2), (w3, b3) = params

    B = obs.shape[0]
    # nn.Flatten(): contiguous reshapes only (no extra HBM pass); stay f32,
    # the bf16 cast happens inside the kernel.
    obs_flat = obs.reshape(B, -1)
    feat_flat = feat.reshape(B, -1)
    d_obs = obs_flat.shape[1]
    d_feat = feat_flat.shape[1]

    # bf16 weights; split w0 so the wrapper-side concat disappears.
    w0 = w0.astype(jnp.bfloat16)
    w0a, w0b = w0[:d_obs], w0[d_obs:]
    w1 = w1.astype(jnp.bfloat16)
    w2 = w2.astype(jnp.bfloat16)
    w3 = w3.astype(jnp.bfloat16)
    A = w3.shape[1]

    # Biases as (1, dim) f32 rows (bias add + ReLU stay in f32).
    b0 = b0.reshape(1, -1).astype(jnp.float32)
    b1 = b1.reshape(1, -1).astype(jnp.float32)
    b2 = b2.reshape(1, -1).astype(jnp.float32)
    b3 = b3.reshape(1, -1).astype(jnp.float32)

    TB = _choose_batch_tile(B, block_b)
    grid = (pl.cdiv(B, TB),)   # ragged last tile: OOB rows are masked on store

    batch_spec = lambda d: pl.BlockSpec((TB, d), lambda i: (i, 0))
    resident = lambda a: pl.BlockSpec(a.shape, lambda i: (0, 0))  # VMEM-resident

    return pl.pallas_call(
        actor_mlp_kernel,
        out_shape=jax.ShapeDtypeStruct((B, A), out_dtype),
        grid=grid,
        in_specs=[
            batch_spec(d_obs), batch_spec(d_feat),
            resident(w0a), resident(w0b), resident(b0),
            resident(w1), resident(b1),
            resident(w2), resident(b2),
            resident(w3), resident(b3),
        ],
        out_specs=pl.BlockSpec((TB, A), lambda i: (i, 0)),
        compiler_params=pltpu.CompilerParams(
            dimension_semantics=("parallel",)),
    )(obs_flat, feat_flat, w0a, w0b, b0, w1, b1, w2, b2, w3, b3)


def init_linear(key, fan_in, fan_out):
    """PyTorch-style Linear init (f32 master weights)."""
    kw, kb = jax.random.split(key)
    bound = 1.0 / jnp.sqrt(jnp.float32(fan_in))
    w = jax.random.uniform(kw, (fan_in, fan_out), jnp.float32, -bound, bound)
    b = jax.random.uniform(kb, (fan_out,), jnp.float32, -bound, bound)
    return w, b


def reference_forward(obs, feat, params, *, out_dtype=jnp.bfloat16):
    """Pure-JAX reference mirroring the kernel's bf16-dot / f32-accumulate math."""
    B = obs.shape[0]
    o = obs.reshape(B, -1).astype(jnp.bfloat16)
    f = feat.reshape(B, -1).astype(jnp.bfloat16)
    d_obs = o.shape[1]
    (w0, b0), (w1, b1), (w2, b2), (w3, b3) = params
    w0 = w0.astype(jnp.bfloat16)
    h = (jnp.dot(o, w0[:d_obs], preferred_element_type=jnp.float32)
         + jnp.dot(f, w0[d_obs:], preferred_element_type=jnp.float32)
         + b0.astype(jnp.float32))
    h = jnp.maximum(h, 0.0)
    for (w, b) in ((w1, b1), (w2, b2), (w3, b3)):
        h = jnp.maximum(
            jnp.dot(h.astype(jnp.bfloat16), w.astype(jnp.bfloat16),
                    preferred_element_type=jnp.float32)
            + b.astype(jnp.float32),
            0.0)
    return h.astype(out_dtype)


if __name__ == "__main__":
    # Small shapes consistent with the module: args.N = 8 -> input dim N*4+8 = 40.
    N = 8
    batch = 2
    num_actions = 16

    key = jax.random.PRNGKey(0)
    k_obs, k_feat, k0, k1, k2, k3 = jax.random.split(key, 6)

    obs = jax.random.normal(k_obs, (batch, N, 4), jnp.float32)   # flattens to 32
    feat = jax.random.normal(k_feat, (batch, 8), jnp.float32)    # flattens to 8

    params = (
        init_linear(k0, N * 4 + 8, 128),       # fc0: Linear(N*4+8, 128) + ReLU
        init_linear(k1, 128, 256),             # fc0: Linear(128, 256)   + ReLU
        init_linear(k2, 256, 256),             # fc1: Linear(256, 256)   + ReLU
        init_linear(k3, 256, num_actions),     # fc2: Linear(256, A)     + ReLU
    )

    # Small-batch path: B=2 runs as one 16-row tile with masked writeback.
    out = jax.block_until_ready(actor_forward(obs, feat, params))
    ref = reference_forward(obs, feat, params)
    assert out.shape == (batch, num_actions)
    assert out.dtype == jnp.bfloat16
    assert jnp.allclose(out.astype(jnp.float32), ref.astype(jnp.float32),
                        atol=2e-2, rtol=2e-2), "mismatch vs reference (B=2)"

    # Larger, non-tile-divisible batch: TB=256, grid=2 (both v7x TCs get work),
    # ragged last block exercises output masking (no wrapper pad/slice passes).
    big_b = 500
    k_obs2, k_feat2 = jax.random.split(jax.random.PRNGKey(1))
    obs_big = jax.random.normal(k_obs2, (big_b, N, 4), jnp.float32)
    feat_big = jax.random.normal(k_feat2, (big_b, 8), jnp.float32)
    out_big = jax.block_until_ready(actor_forward(obs_big, feat_big, params))
    ref_big = reference_forward(obs_big, feat_big, params)
    assert out_big.shape == (big_b, num_actions)
    assert jnp.allclose(out_big.astype(jnp.float32), ref_big.astype(jnp.float32),
                        atol=2e-2, rtol=2e-2), "mismatch vs reference (B=500)"

    # TODO(synk): `action_probs.detach().cpu()` is an autograd/host-transfer
    # detail with no Pallas equivalent; the kernel returns the device array.
    print("KERNEL_OK")
</pallas_src>

<mosaic_0001>
module attributes {stable_mosaic.version = 11 : i64} {
  func.func @actor_mlp_kernel(%arg0: i32, %arg1: memref<16x32xf32, #tpu.memory_space<vmem>>, %arg2: memref<16x8xf32, #tpu.memory_space<vmem>>, %arg3: memref<32x128xbf16, #tpu.memory_space<vmem>>, %arg4: memref<8x128xbf16, #tpu.memory_space<vmem>>, %arg5: memref<1x128xf32, #tpu.memory_space<vmem>>, %arg6: memref<128x256xbf16, #tpu.memory_space<vmem>>, %arg7: memref<1x256xf32, #tpu.memory_space<vmem>>, %arg8: memref<256x256xbf16, #tpu.memory_space<vmem>>, %arg9: memref<1x256xf32, #tpu.memory_space<vmem>>, %arg10: memref<256x16xbf16, #tpu.memory_space<vmem>>, %arg11: memref<1x16xf32, #tpu.memory_space<vmem>>, %arg12: memref<16x16xbf16, #tpu.memory_space<vmem>>) attributes {dimension_semantics = [#tpu.dimension_semantics<parallel>], iteration_bounds = array<i64: 1>, scalar_prefetch = 0 : i64, scratch_operands = 0 : i64, tpu.core_type = #tpu.core_type<tc>, window_params = [{transform_indices = @transform_0, window_bounds = array<i64: 16, 32>}, {transform_indices = @transform_1, window_bounds = array<i64: 16, 8>}, {pipeline_mode = #tpu.pipeline_mode<synchronous>, transform_indices = @transform_2, window_bounds = array<i64: 32, 128>}, {pipeline_mode = #tpu.pipeline_mode<synchronous>, transform_indices = @transform_3, window_bounds = array<i64: 8, 128>}, {pipeline_mode = #tpu.pipeline_mode<synchronous>, transform_indices = @transform_4, window_bounds = array<i64: 1, 128>}, {pipeline_mode = #tpu.pipeline_mode<synchronous>, transform_indices = @transform_5, window_bounds = array<i64: 128, 256>}, {pipeline_mode = #tpu.pipeline_mode<synchronous>, transform_indices = @transform_6, window_bounds = array<i64: 1, 256>}, {pipeline_mode = #tpu.pipeline_mode<synchronous>, transform_indices = @transform_7, window_bounds = array<i64: 256, 256>}, {pipeline_mode = #tpu.pipeline_mode<synchronous>, transform_indices = @transform_8, window_bounds = array<i64: 1, 256>}, {pipeline_mode = #tpu.pipeline_mode<synchronous>, transform_indices = @transform_9, window_bounds = array<i64: 256, 16>}, {pipeline_mode = #tpu.pipeline_mode<synchronous>, transform_indices = @transform_10, window_bounds = array<i64: 1, 16>}, {transform_indices = @transform_11, window_bounds = array<i64: 16, 16>}]} {
    %c0 = arith.constant 0 : index
    %c0_0 = arith.constant 0 : index
    %0 = vector.load %arg1[%c0, %c0_0] : memref<16x32xf32, #tpu.memory_space<vmem>>, vector<16x32xf32>
    %1 = arith.truncf %0 : vector<16x32xf32> to vector<16x32xbf16>
    %c0_1 = arith.constant 0 : index
    %c0_2 = arith.constant 0 : index
    %2 = vector.load %arg2[%c0_1, %c0_2] : memref<16x8xf32, #tpu.memory_space<vmem>>, vector<16x8xf32>
    %3 = arith.truncf %2 : vector<16x8xf32> to vector<16x8xbf16>
    %c0_3 = arith.constant 0 : index
    %c0_4 = arith.constant 0 : index
    %4 = vector.load %arg3[%c0_3, %c0_4] : memref<32x128xbf16, #tpu.memory_space<vmem>>, vector<32x128xbf16>
    %cst = arith.constant dense<0.000000e+00> : vector<16x128xf32>
    %5 = tpu.matmul %1, %4, %cst {dimension_numbers = #tpu.dot_dimension_numbers<[1], [0], [0], [1], [0, 0, 1, 1], [], []>} : vector<16x32xbf16>, vector<32x128xbf16>, vector<16x128xf32> -> vector<16x128xf32>
    %c0_5 = arith.constant 0 : index
    %c0_6 = arith.constant 0 : index
    %6 = vector.load %arg4[%c0_5, %c0_6] : memref<8x128xbf16, #tpu.memory_space<vmem>>, vector<8x128xbf16>
    %cst_7 = arith.constant dense<0.000000e+00> : vector<16x128xf32>
    %7 = tpu.matmul %3, %6, %cst_7 {dimension_numbers = #tpu.dot_dimension_numbers<[1], [0], [0], [1], [0, 0, 1, 1], [], []>} : vector<16x8xbf16>, vector<8x128xbf16>, vector<16x128xf32> -> vector<16x128xf32>
    %8 = arith.addf %5, %7 : vector<16x128xf32>
    %c0_8 = arith.constant 0 : index
    %c0_9 = arith.constant 0 : index
    %9 = vector.load %arg5[%c0_8, %c0_9] : memref<1x128xf32, #tpu.memory_space<vmem>>, vector<1x128xf32>
    %10 = vector.broadcast %9 : vector<1x128xf32> to vector<16x128xf32>
    %11 = arith.addf %8, %10 : vector<16x128xf32>
    %cst_10 = arith.constant 0.000000e+00 : f32
    %12 = vector.broadcast %cst_10 : f32 to vector<16x128xf32>
    %13 = arith.maximumf %11, %12 : vector<16x128xf32>
    %14 = arith.truncf %13 : vector<16x128xf32> to vector<16x128xbf16>
    %c0_11 = arith.constant 0 : index
    %c0_12 = arith.constant 0 : index
    %15 = vector.load %arg6[%c0_11, %c0_12] : memref<128x256xbf16, #tpu.memory_space<vmem>>, vector<128x256xbf16>
    %cst_13 = arith.constant dense<0.000000e+00> : vector<16x256xf32>
    %16 = tpu.matmul %14, %15, %cst_13 {dimension_numbers = #tpu.dot_dimension_numbers<[1], [0], [0], [1], [0, 0, 1, 1], [], []>} : vector<16x128xbf16>, vector<128x256xbf16>, vector<16x256xf32> -> vector<16x256xf32>
    %c0_14 = arith.constant 0 : index
    %c0_15 = arith.constant 0 : index
    %17 = vector.load %arg7[%c0_14, %c0_15] : memref<1x256xf32, #tpu.memory_space<vmem>>, vector<1x256xf32>
    %18 = vector.broadcast %17 : vector<1x256xf32> to vector<16x256xf32>
    %19 = arith.addf %16, %18 : vector<16x256xf32>
    %cst_16 = arith.constant 0.000000e+00 : f32
    %20 = vector.broadcast %cst_16 : f32 to vector<16x256xf32>
    %21 = arith.maximumf %19, %20 : vector<16x256xf32>
    %22 = arith.truncf %21 : vector<16x256xf32> to vector<16x256xbf16>
    %c0_17 = arith.constant 0 : index
    %c0_18 = arith.constant 0 : index
    %23 = vector.load %arg8[%c0_17, %c0_18] : memref<256x256xbf16, #tpu.memory_space<vmem>>, vector<256x256xbf16>
    %cst_19 = arith.constant dense<0.000000e+00> : vector<16x256xf32>
    %24 = tpu.matmul %22, %23, %cst_19 {dimension_numbers = #tpu.dot_dimension_numbers<[1], [0], [0], [1], [0, 0, 1, 1], [], []>} : vector<16x256xbf16>, vector<256x256xbf16>, vector<16x256xf32> -> vector<16x256xf32>
    %c0_20 = arith.constant 0 : index
    %c0_21 = arith.constant 0 : index
    %25 = vector.load %arg9[%c0_20, %c0_21] : memref<1x256xf32, #tpu.memory_space<vmem>>, vector<1x256xf32>
    %26 = vector.broadcast %25 : vector<1x256xf32> to vector<16x256xf32>
    %27 = arith.addf %24, %26 : vector<16x256xf32>
    %cst_22 = arith.constant 0.000000e+00 : f32
    %28 = vector.broadcast %cst_22 : f32 to vector<16x256xf32>
    %29 = arith.maximumf %27, %28 : vector<16x256xf32>
    %30 = arith.truncf %29 : vector<16x256xf32> to vector<16x256xbf16>
    %c0_23 = arith.constant 0 : index
    %c0_24 = arith.constant 0 : index
    %31 = vector.load %arg10[%c0_23, %c0_24] : memref<256x16xbf16, #tpu.memory_space<vmem>>, vector<256x16xbf16>
    %cst_25 = arith.constant dense<0.000000e+00> : vector<16x16xf32>
    %32 = tpu.matmul %30, %31, %cst_25 {dimension_numbers = #tpu.dot_dimension_numbers<[1], [0], [0], [1], [0, 0, 1, 1], [], []>} : vector<16x256xbf16>, vector<256x16xbf16>, vector<16x16xf32> -> vector<16x16xf32>
    %c0_26 = arith.constant 0 : index
    %c0_27 = arith.constant 0 : index
    %33 = vector.load %arg11[%c0_26, %c0_27] : memref<1x16xf32, #tpu.memory_space<vmem>>, vector<1x16xf32>
    %34 = vector.broadcast %33 : vector<1x16xf32> to vector<16x16xf32>
    %35 = arith.addf %32, %34 : vector<16x16xf32>
    %cst_28 = arith.constant 0.000000e+00 : f32
    %36 = vector.broadcast %cst_28 : f32 to vector<16x16xf32>
    %37 = arith.maximumf %35, %36 : vector<16x16xf32>
    %38 = arith.truncf %37 : vector<16x16xf32> to vector<16x16xbf16>
    %c0_29 = arith.constant 0 : index
    %c0_30 = arith.constant 0 : index
    %39 = vector.load %arg12[%c0_29, %c0_30] : memref<16x16xbf16, #tpu.memory_space<vmem>>, vector<16x16xbf16>
    tpu.vector_store %arg12[%c0_29, %c0_30], %38 {strides = array<i32>} : memref<16x16xbf16, #tpu.memory_space<vmem>>, vector<16x16xbf16>,
    return
  }
  func.func @transform_0(%arg0: i32) -> (i32, i32) {
    %c0_i32 = arith.constant 0 : i32
    %c0_i32_0 = arith.constant 0 : i32
    return %arg0, %c0_i32 : i32, i32
  }
  func.func @transform_1(%arg0: i32) -> (i32, i32) {
    %c0_i32 = arith.constant 0 : i32
    %c0_i32_0 = arith.constant 0 : i32
    return %arg0, %c0_i32 : i32, i32
  }
  func.func @transform_2(%arg0: i32) -> (i32, i32) {
    %c0_i32 = arith.constant 0 : i32
    %c0_i32_0 = arith.constant 0 : i32
    %c0_i32_1 = arith.constant 0 : i32
    return %c0_i32, %c0_i32_0 : i32, i32
  }
  func.func @transform_3(%arg0: i32) -> (i32, i32) {
    %c0_i32 = arith.constant 0 : i32
    %c0_i32_0 = arith.constant 0 : i32
    %c0_i32_1 = arith.constant 0 : i32
    return %c0_i32, %c0_i32_0 : i32, i32
  }
  func.func @transform_4(%arg0: i32) -> (i32, i32) {
    %c0_i32 = arith.constant 0 : i32
    %c0_i32_0 = arith.constant 0 : i32
    %c0_i32_1 = arith.constant 0 : i32
    return %c0_i32, %c0_i32_0 : i32, i32
  }
  func.func @transform_5(%arg0: i32) -> (i32, i32) {
    %c0_i32 = arith.constant 0 : i32
    %c0_i32_0 = arith.constant 0 : i32
    %c0_i32_1 = arith.constant 0 : i32
    return %c0_i32, %c0_i32_0 : i32, i32
  }
  func.func @transform_6(%arg0: i32) -> (i32, i32) {
    %c0_i32 = arith.constant 0 : i32
    %c0_i32_0 = arith.constant 0 : i32
    %c0_i32_1 = arith.constant 0 : i32
    return %c0_i32, %c0_i32_0 : i32, i32
  }
  func.func @transform_7(%arg0: i32) -> (i32, i32) {
    %c0_i32 = arith.constant 0 : i32
    %c0_i32_0 = arith.constant 0 : i32
    %c0_i32_1 = arith.constant 0 : i32
    return %c0_i32, %c0_i32_0 : i32, i32
  }
  func.func @transform_8(%arg0: i32) -> (i32, i32) {
    %c0_i32 = arith.constant 0 : i32
    %c0_i32_0 = arith.constant 0 : i32
    %c0_i32_1 = arith.constant 0 : i32
    return %c0_i32, %c0_i32_0 : i32, i32
  }
  func.func @transform_9(%arg0: i32) -> (i32, i32) {
    %c0_i32 = arith.constant 0 : i32
    %c0_i32_0 = arith.constant 0 : i32
    %c0_i32_1 = arith.constant 0 : i32
    return %c0_i32, %c0_i32_0 : i32, i32
  }
  func.func @transform_10(%arg0: i32) -> (i32, i32) {
    %c0_i32 = arith.constant 0 : i32
    %c0_i32_0 = arith.constant 0 : i32
    %c0_i32_1 = arith.constant 0 : i32
    return %c0_i32, %c0_i32_0 : i32, i32
  }
  func.func @transform_11(%arg0: i32) -> (i32, i32) {
    %c0_i32 = arith.constant 0 : i32
    %c0_i32_0 = arith.constant 0 : i32
    return %arg0, %c0_i32 : i32, i32
  }
}

</mosaic_0001>

<llo_original>
// kernel: tpu_custom_call.1
$region0: #{tpu_custom_call.1}
  #allocation0 [shape = 'u32[]', space=smem, size = 0x4, offset = 0x4, fixed_abs, tag = 'smem constant byte address 0x4 - core index']
  #allocation1 [shape = 'u32[144,128]{1,0:T(1,128)}', space=vmem, size = 0x12000, scoped, tag = 'internal scratch']
  %s0 = inlined_call_operand.vmem [shape: f32[2,32], index: 0, kind: input, shape index: {}]
  %s1 = inlined_call_operand.vmem [shape: f32[2,8], index: 1, kind: input, shape index: {}]
  %s2 = inlined_call_operand.vmem [shape: bf16[32,128], index: 2, kind: input, shape index: {}]
  %s3 = inlined_call_operand.vmem [shape: bf16[8,128], index: 3, kind: input, shape index: {}]
  %s4 = inlined_call_operand.vmem [shape: f32[1,128], index: 4, kind: input, shape index: {}]
  %s5 = inlined_call_operand.vmem [shape: bf16[128,256], index: 5, kind: input, shape index: {}]
  %s6 = inlined_call_operand.vmem [shape: f32[1,256], index: 6, kind: input, shape index: {}]
  %s7 = inlined_call_operand.hbm [shape: bf16[256,256], index: 7, kind: input, shape index: {}]
  %s8 = inlined_call_operand.vmem [shape: f32[1,256], index: 8, kind: input, shape index: {}]
  %s9 = inlined_call_operand.vmem [shape: bf16[256,16], index: 9, kind: input, shape index: {}]
  %s10 = inlined_call_operand.vmem [shape: f32[1,16], index: 10, kind: input, shape index: {}]
  %s11 = inlined_call_operand.hbm [shape: bf16[2,16], index: 11, kind: output, shape index: {}]
  %s12 = sld [smem:[#allocation0]]
  $region58: #{tpu_custom_call.1} parent=0
    _
  %s14 = ssub.s32 1, %s12
  %s15 = scalar_select 0, %s14, %s12
  $region1: #{tpu_custom_call.1} parent=0
    #allocation2 [shape = 'u8[131072]{0}', space=vmem, size = 0x20000, scoped, tag = 'input window, operand 7, single buffered']
    #allocation3 [shape = 's32[1]{0}', space=sflag, size = 0x4, scoped, tag = 'scoped memory for tpu_custom_call.1']
    #allocation4 [shape = 's32[1]{0}', space=sflag, size = 0x4, scoped, tag = 'scoped memory for tpu_custom_call.1']
    #allocation5 [shape = 'u8[4096]{0}', space=vmem, size = 0x1000, scoped, tag = 'output window, operand 0, single buffered']
    %16 = vsyncpa [#allocation3], 0
    %17 = vsyncpa [#allocation4], 0
    // Predicated region
    $region2: #{tpu_custom_call.1} parent=1 // pred_check
      _
    $region3: #{tpu_custom_call.1} parent=1 // pred_check_branch
      %19 = sbr.rel (0) target = $region5
    $region4: #{tpu_custom_call.1} parent=1 // pred_region
      _
    $region5: #{tpu_custom_call.1} parent=1 // pred_fallthru
      _
    // Predicated region
    $region6: #{tpu_custom_call.1} parent=1 // pred_check
      _
    $region7: #{tpu_custom_call.1} parent=1 // pred_check_branch
      %21 = sbr.rel (0) target = $region9
    $region8: #{tpu_custom_call.1} parent=1 // pred_region
      _
    $region9: #{tpu_custom_call.1} parent=1 // pred_fallthru
      _
    // Predicated region
    $region10: #{tpu_custom_call.1} parent=1 // pred_check
      _
    $region11: #{tpu_custom_call.1} parent=1 // pred_check_branch
      %23 = sbr.rel (0) target = $region13
    $region12: #{tpu_custom_call.1} parent=1 // pred_region
      _
    $region13: #{tpu_custom_call.1} parent=1 // pred_fallthru
      _
    // Predicated region
    $region14: #{tpu_custom_call.1} parent=1 // pred_check
      _
    $region15: #{tpu_custom_call.1} parent=1 // pred_check_branch
      %25 = sbr.rel (0) target = $region17
    $region16: #{tpu_custom_call.1} parent=1 // pred_region
      _
    $region17: #{tpu_custom_call.1} parent=1 // pred_fallthru
      _
    // Predicated region
    $region18: #{tpu_custom_call.1} parent=1 // pred_check
      _
    $region19: #{tpu_custom_call.1} parent=1 // pred_check_branch
      %27 = sbr.rel (0) target = $region21
    $region20: #{tpu_custom_call.1} parent=1 // pred_region
      _
    $region21: #{tpu_custom_call.1} parent=1 // pred_fallthru
      _
    // Predicated region
    $region22: #{tpu_custom_call.1} parent=1 // pred_check
      _
    $region23: #{tpu_custom_call.1} parent=1 // pred_check_branch
      %29 = sbr.rel (0) target = $region25
    $region24: #{tpu_custom_call.1} parent=1 // pred_region
      _
    $region25: #{tpu_custom_call.1} parent=1 // pred_fallthru
      _
    // Predicated region
    $region26: #{tpu_custom_call.1} parent=1 // pred_check
      _
    $region27: #{tpu_custom_call.1} parent=1 // pred_check_branch
      %31 = sbr.rel (0) target = $region29
    $region28: #{tpu_custom_call.1} parent=1 // pred_region
      _
    $region29: #{tpu_custom_call.1} parent=1 // pred_fallthru
      _
    // Predicated region
    $region30: #{tpu_custom_call.1} parent=1 // pred_check
      _
    $region31: #{tpu_custom_call.1} parent=1 // pred_check_branch
      %33 = sbr.rel (0) target = $region33
    $region32: #{tpu_custom_call.1} parent=1 // pred_region
      %s35 = ssub.s32 4096, 4096
      %36 = vsyncadd [#allocation3], %s35
      %s37 = sshll.u32 [#allocation2], 4
      %s38 = int_to_ptr.vmem [resolvable:$true] %s37
      %43 = dma.hbm_to_vmem [thread:$0]  %s7, 4096, %s38, [#allocation3], 128, 128, 8
    $region33: #{tpu_custom_call.1} parent=1 // pred_fallthru
      _
    // Predicated region
    $region34: #{tpu_custom_call.1} parent=1 // pred_check
      _
    $region35: #{tpu_custom_call.1} parent=1 // pred_check_branch
      %45 = sbr.rel (0) target = $region37
    $region36: #{tpu_custom_call.1} parent=1 // pred_region
      _
    $region37: #{tpu_custom_call.1} parent=1 // pred_fallthru
      _
    // Predicated region
    $region38: #{tpu_custom_call.1} parent=1 // pred_check
      _
    $region39: #{tpu_custom_call.1} parent=1 // pred_check_branch
      %47 = sbr.rel (0) target = $region41
    $region40: #{tpu_custom_call.1} parent=1 // pred_region
      _
    $region41: #{tpu_custom_call.1} parent=1 // pred_fallthru
      _
    // Predicated region
    $region42: #{tpu_custom_call.1} parent=1 // pred_check
      _
    $region43: #{tpu_custom_call.1} parent=1 // pred_check_branch
      %49 = sbr.rel (0) target = $region45
    $region44: #{tpu_custom_call.1} parent=1 // pred_region
      _
    $region45: #{tpu_custom_call.1} parent=1 // pred_fallthru
      _
    // Predicated region
    $region46: #{tpu_custom_call.1} parent=1 // pred_check
      _
    $region47: #{tpu_custom_call.1} parent=1 // pred_check_branch
      %51 = sbr.rel (0) target = $region49
    $region48: #{tpu_custom_call.1} parent=1 // pred_region
      %52 = dma.done [#allocation3], 4096
    $region49: #{tpu_custom_call.1} parent=1 // pred_fallthru
      _
    %v54 = vld [vmem:[%s0] sm:$0xff]
    %v55 = vld [vmem:[%s0 + $0x8] sm:$0xff]
    %v56 = vpack.c.bf16 %v55, %v54
    %v57 = vld [vmem:[%s1] sm:$0xff]
    %v58 = vld [vmem:[%s1 + $0x8] sm:$0xff]
    %v59 = vpack.c.bf16 %v58, %v57
    %v60 = vld [vmem:[%s2] sm:$0xf]
    %v61 = vld [vmem:[%s2 + $0x4] sm:$0xf]
    %v62 = vld [vmem:[%s2 + $0x8] sm:$0xf]
    %v63 = vld [vmem:[%s2 + $0xc] sm:$0xf]
    %v64 = vld [vmem:[%s3] sm:$0xf]
    %vm65 = vcmask 64512
    %v67 = vsel %vm65, %v59, 0
    %vm69 = vcmask 1043456
    %v71 = vsel %vm69, %v64, 0
    %73 = vmatprep.subr.bf16.mxu0 0
    %74 = vmatpush1.bf16.msra.mxu0 %v71
    %75 = vmatprep.subr.bf16.mxu0 0
    %76 = vmatpush1.bf16.msra.mxu0 0
    %77 = vmatprep.subr.bf16.mxu0 0
    %78 = vmatpush1.bf16.msra.mxu0 0
    %79 = vmatprep.subr.bf16.mxu0 0
    %80 = vmatpush1.bf16.msra.mxu0 0
    %81 = vmatprep.subr.bf16.mxu0 0
    %82 = vmatpush1.bf16.msra.mxu0 0
    %83 = vmatprep.subr.bf16.mxu0 0
    %84 = vmatpush1.bf16.msra.mxu0 0
    %85 = vmatprep.subr.bf16.mxu0 0
    %86 = vmatpush1.bf16.msra.mxu0 0
    %87 = vmatprep.subr.bf16.mxu0 0
    %88 = vmatpush1.bf16.msra.mxu0 0
    %89 = vmatprep.subr.bf16.mxu0 0
    %90 = vmatpush1.bf16.msra.mxu0 0
    %91 = vmatprep.subr.bf16.mxu0 0
    %92 = vmatpush1.bf16.msra.mxu0 0
    %93 = vmatprep.subr.bf16.mxu0 0
    %94 = vmatpush1.bf16.msra.mxu0 0
    %95 = vmatprep.subr.bf16.mxu0 0
    %96 = vmatpush1.bf16.msra.mxu0 0
    %97 = vmatprep.subr.bf16.mxu0 0
    %98 = vmatpush1.bf16.msra.mxu0 0
    %99 = vmatprep.subr.bf16.mxu0 0
    %100 = vmatpush1.bf16.msra.mxu0 0
    %101 = vmatprep.subr.bf16.mxu0 0
    %102 = vmatpush1.bf16.msra.mxu0 0
    %103 = vmatprep.subr.bf16.mxu0 0
    %104 = vmatpush1.bf16.msra.mxu0 0
    %105 = vmatprep.mubr.bf16.mxu0 0
    %106 = vmatmul.mubr.bf16.gmra.mrb[0].mxu0 %v67
    %v107 = vpop.f32.mrb[0].mxu0
    %v108 = vadd.f32 0.0, %v107
    %v109 = vpop.f32.mrb[0].mxu0
    %v110 = vpop.f32.mrb[0].mxu0
    %v111 = vadd.f32 0.0, %v110
    %v112 = vpop.f32.mrb[0].mxu0
    %113 = vdwg.mxu0
    %v118 = vunpack.c.l.b16 %v60
    %v119 = vunpack.c.l.b16 %v61
    %v120 = vunpack.c.l.b16 %v62
    %v121 = vunpack.c.l.b16 %v63
    %v122 = vpack.c.b16 %v119, %v118
    %v123 = vpack.c.b16 %v121, %v120
    %vm126 = vcmask 261120
    %v128 = vsel %vm126, %v56, 0
    %130 = vmatprep.subr.bf16.mxu0 0
    %131 = vmatpush1.bf16.msra.mxu0 %v122
    %132 = vmatprep.subr.bf16.mxu0 0
    %133 = vmatpush1.bf16.msra.mxu0 %v123
    %134 = vmatprep.subr.bf16.mxu0 0
    %135 = vmatpush1.bf16.msra.mxu0 0
    %136 = vmatprep.subr.bf16.mxu0 0
    %137 = vmatpush1.bf16.msra.mxu0 0
    %138 = vmatprep.subr.bf16.mxu0 0
    %139 = vmatpush1.bf16.msra.mxu0 0
    %140 = vmatprep.subr.bf16.mxu0 0
    %141 = vmatpush1.bf16.msra.mxu0 0
    %142 = vmatprep.subr.bf16.mxu0 0
    %143 = vmatpush1.bf16.msra.mxu0 0
    %144 = vmatprep.subr.bf16.mxu0 0
    %145 = vmatpush1.bf16.msra.mxu0 0
    %146 = vmatprep.subr.bf16.mxu0 0
    %147 = vmatpush1.bf16.msra.mxu0 0
    %148 = vmatprep.subr.bf16.mxu0 0
    %149 = vmatpush1.bf16.msra.mxu0 0
    %150 = vmatprep.subr.bf16.mxu0 0
    %151 = vmatpush1.bf16.msra.mxu0 0
    %152 = vmatprep.subr.bf16.mxu0 0
    %153 = vmatpush1.bf16.msra.mxu0 0
    %154 = vmatprep.subr.bf16.mxu0 0
    %155 = vmatpush1.bf16.msra.mxu0 0
    %156 = vmatprep.subr.bf16.mxu0 0
    %157 = vmatpush1.bf16.msra.mxu0 0
    %158 = vmatprep.subr.bf16.mxu0 0
    %159 = vmatpush1.bf16.msra.mxu0 0
    %160 = vmatprep.subr.bf16.mxu0 0
    %161 = vmatpush1.bf16.msra.mxu0 0
    %162 = vmatprep.mubr.bf16.mxu0 0
    %163 = vmatmul.mubr.bf16.gmra.mrb[0].mxu0 %v128
    %v164 = vpop.f32.mrb[0].mxu0
    %v165 = vadd.f32 %v108, %v164
    %v166 = vpop.f32.mrb[0].mxu0
    %v167 = vpop.f32.mrb[0].mxu0
    %v168 = vadd.f32 %v111, %v167
    %v169 = vpop.f32.mrb[0].mxu0
    %170 = vdwg.mxu0
    %v171 = vld [vmem:[%s4] sm:$0x1]
    %v173 = vlaneseq
    %v174 = vshrl.u32 %v173, 7
    %v175 = vsub.s32 0, %v174
    %v176 = vrot.slane %v171, %v175
    %v178 = vadd.f32 %v165, %v176
    %v179 = vadd.f32 %v168, %v176
    %v180 = vmax.f32 %v178, 0.0
    %v181 = vmax.f32 %v179, 0.0
    %v182 = vpack.c.bf16 %v181, %v180
    %v183 = vld [vmem:[%s5] sm:$0xff]
    %v184 = vld [vmem:[%s5 + $0x8] sm:$0xff]
    %v185 = vld [vmem:[%s5 + $0x10] sm:$0xff]
    %v186 = vld [vmem:[%s5 + $0x18] sm:$0xff]
    %v187 = vld [vmem:[%s5 + $0x20] sm:$0xff]
    %v188 = vld [vmem:[%s5 + $0x28] sm:$0xff]
    %v189 = vld [vmem:[%s5 + $0x30] sm:$0xff]
    %v190 = vld [vmem:[%s5 + $0x38] sm:$0xff]
    %v191 = vld [vmem:[%s5 + $0x40] sm:$0xff]
    %v192 = vld [vmem:[%s5 + $0x48] sm:$0xff]
    %v193 = vld [vmem:[%s5 + $0x50] sm:$0xff]
    %v194 = vld [vmem:[%s5 + $0x58] sm:$0xff]
    %v195 = vld [vmem:[%s5 + $0x60] sm:$0xff]
    %v196 = vld [vmem:[%s5 + $0x68] sm:$0xff]
    %v197 = vld [vmem:[%s5 + $0x70] sm:$0xff]
    %v198 = vld [vmem:[%s5 + $0x78] sm:$0xff]
    %v199 = vld [vmem:[%s6] sm:$0x3]
    %v201 = vlaneseq
    %v202 = vshrl.u32 %v201, 7
    %v203 = vsub.s32 0, %v202
    %v204 = vrot.slane %v199, %v203
    %v205 = vlaneseq
    %v206 = vshrl.u32 %v205, 7
    %v207 = vsub.s32 1, %v206
    %v208 = vrot.slane %v199, %v207
    %v227 = vunpack.c.l.b16 %v183
    %v228 = vunpack.c.h.b16 %v183
    %v229 = vunpack.c.l.b16 %v184
    %v230 = vunpack.c.h.b16 %v184
    %v231 = vunpack.c.l.b16 %v185
    %v232 = vunpack.c.h.b16 %v185
    %v233 = vunpack.c.l.b16 %v186
    %v234 = vunpack.c.h.b16 %v186
    %v235 = vunpack.c.l.b16 %v187
    %v236 = vunpack.c.h.b16 %v187
    %v237 = vunpack.c.l.b16 %v188
    %v238 = vunpack.c.h.b16 %v188
    %v239 = vunpack.c.l.b16 %v189
    %v240 = vunpack.c.h.b16 %v189
    %v241 = vunpack.c.l.b16 %v190
    %v242 = vunpack.c.h.b16 %v190
    %v243 = vunpack.c.l.b16 %v191
    %v244 = vunpack.c.h.b16 %v191
    %v245 = vunpack.c.l.b16 %v192
    %v246 = vunpack.c.h.b16 %v192
    %v247 = vunpack.c.l.b16 %v193
    %v248 = vunpack.c.h.b16 %v193
    %v249 = vunpack.c.l.b16 %v194
    %v250 = vunpack.c.h.b16 %v194
    %v251 = vunpack.c.l.b16 %v195
    %v252 = vunpack.c.h.b16 %v195
    %v253 = vunpack.c.l.b16 %v196
    %v254 = vunpack.c.h.b16 %v196
    %v255 = vunpack.c.l.b16 %v197
    %v256 = vunpack.c.h.b16 %v197
    %v257 = vunpack.c.l.b16 %v198
    %v258 = vunpack.c.h.b16 %v198
    %v259 = vpack.c.b16 %v229, %v227
    %v260 = vpack.c.b16 %v230, %v228
    %v261 = vpack.c.b16 %v233, %v231
    %v262 = vpack.c.b16 %v234, %v232
    %v263 = vpack.c.b16 %v237, %v235
    %v264 = vpack.c.b16 %v238, %v236
    %v265 = vpack.c.b16 %v241, %v239
    %v266 = vpack.c.b16 %v242, %v240
    %v267 = vpack.c.b16 %v245, %v243
    %v268 = vpack.c.b16 %v246, %v244
    %v269 = vpack.c.b16 %v249, %v247
    %v270 = vpack.c.b16 %v250, %v248
    %v271 = vpack.c.b16 %v253, %v251
    %v272 = vpack.c.b16 %v254, %v252
    %v273 = vpack.c.b16 %v257, %v255
    %v274 = vpack.c.b16 %v258, %v256
    %291 = vmatprep.subr.bf16.mxu0 %v260
    %292 = vmatpush1.bf16.msra.mxu0 %v259
    %293 = vmatprep.subr.bf16.mxu0 %v262
    %294 = vmatpush1.bf16.msra.mxu0 %v261
    %295 = vmatprep.subr.bf16.mxu0 %v264
    %296 = vmatpush1.bf16.msra.mxu0 %v263
    %297 = vmatprep.subr.bf16.mxu0 %v266
    %298 = vmatpush1.bf16.msra.mxu0 %v265
    %299 = vmatprep.subr.bf16.mxu0 %v268
    %300 = vmatpush1.bf16.msra.mxu0 %v267
    %301 = vmatprep.subr.bf16.mxu0 %v270
    %302 = vmatpush1.bf16.msra.mxu0 %v269
    %303 = vmatprep.subr.bf16.mxu0 %v272
    %304 = vmatpush1.bf16.msra.mxu0 %v271
    %305 = vmatprep.subr.bf16.mxu0 %v274
    %306 = vmatpush1.bf16.msra.mxu0 %v273
    %307 = vmatprep.subr.bf16.mxu0 0
    %308 = vmatpush1.bf16.msra.mxu0 0
    %309 = vmatprep.subr.bf16.mxu0 0
    %310 = vmatpush1.bf16.msra.mxu0 0
    %311 = vmatprep.subr.bf16.mxu0 0
    %312 = vmatpush1.bf16.msra.mxu0 0
    %313 = vmatprep.subr.bf16.mxu0 0
    %314 = vmatpush1.bf16.msra.mxu0 0
    %315 = vmatprep.subr.bf16.mxu0 0
    %316 = vmatpush1.bf16.msra.mxu0 0
    %317 = vmatprep.subr.bf16.mxu0 0
    %318 = vmatpush1.bf16.msra.mxu0 0
    %319 = vmatprep.subr.bf16.mxu0 0
    %320 = vmatpush1.bf16.msra.mxu0 0
    %321 = vmatprep.subr.bf16.mxu0 0
    %322 = vmatpush1.bf16.msra.mxu0 0
    %323 = vmatprep.mubr.bf16.mxu0 0
    %324 = vmatmul.mubr.bf16.gmra.mrb[0].mxu0 %v182
    %v325 = vpop.f32.mrb[0].mxu0
    %v326 = vadd.f32 %v204, %v325
    %v327 = vpop.f32.mrb[0].mxu0
    %v328 = vadd.f32 %v208, %v327
    %v329 = vpop.f32.mrb[0].mxu0
    %v330 = vadd.f32 %v204, %v329
    %v331 = vpop.f32.mrb[0].mxu0
    %v332 = vadd.f32 %v208, %v331
    %333 = vdwg.mxu0
    %v334 = vmax.f32 %v326, 0.0
    %v335 = vmax.f32 %v328, 0.0
    %v336 = vmax.f32 %v330, 0.0
    %v337 = vmax.f32 %v332, 0.0
    %v338 = vpack.c.bf16 %v336, %v334
    %v339 = vpack.c.bf16 %v337, %v335
    %v340 = vld [vmem:[#allocation2] sm:$0xff]
    %v341 = vld [vmem:[#allocation2 + $0x8] sm:$0xff]
    %v342 = vld [vmem:[#allocation2 + $0x10] sm:$0xff]
    %v343 = vld [vmem:[#allocation2 + $0x18] sm:$0xff]
    %v344 = vld [vmem:[#allocation2 + $0x20] sm:$0xff]
    %v345 = vld [vmem:[#allocation2 + $0x28] sm:$0xff]
    %v346 = vld [vmem:[#allocation2 + $0x30] sm:$0xff]
    %v347 = vld [vmem:[#allocation2 + $0x38] sm:$0xff]
    %v348 = vld [vmem:[#allocation2 + $0x40] sm:$0xff]
    %v349 = vld [vmem:[#allocation2 + $0x48] sm:$0xff]
    %v350 = vld [vmem:[#allocation2 + $0x50] sm:$0xff]
    %v351 = vld [vmem:[#allocation2 + $0x58] sm:$0xff]
    %v352 = vld [vmem:[#allocation2 + $0x60] sm:$0xff]
    %v353 = vld [vmem:[#allocation2 + $0x68] sm:$0xff]
    %v354 = vld [vmem:[#allocation2 + $0x70] sm:$0xff]
    %v355 = vld [vmem:[#allocation2 + $0x78] sm:$0xff]
    %v356 = vld [vmem:[#allocation2 + $0x80] sm:$0xff]
    %v357 = vld [vmem:[#allocation2 + $0x88] sm:$0xff]
    %v358 = vld [vmem:[#allocation2 + $0x90] sm:$0xff]
    %v359 = vld [vmem:[#allocation2 + $0x98] sm:$0xff]
    %v360 = vld [vmem:[#allocation2 + $0xa0] sm:$0xff]
    %v361 = vld [vmem:[#allocation2 + $0xa8] sm:$0xff]
    %v362 = vld [vmem:[#allocation2 + $0xb0] sm:$0xff]
    %v363 = vld [vmem:[#allocation2 + $0xb8] sm:$0xff]
    %v364 = vld [vmem:[#allocation2 + $0xc0] sm:$0xff]
    %v365 = vld [vmem:[#allocation2 + $0xc8] sm:$0xff]
    %v366 = vld [vmem:[#allocation2 + $0xd0] sm:$0xff]
    %v367 = vld [vmem:[#allocation2 + $0xd8] sm:$0xff]
    %v368 = vld [vmem:[#allocation2 + $0xe0] sm:$0xff]
    %v369 = vld [vmem:[#allocation2 + $0xe8] sm:$0xff]
    %v370 = vld [vmem:[#allocation2 + $0xf0] sm:$0xff]
    %v371 = vld [vmem:[#allocation2 + $0xf8] sm:$0xff]
    %v372 = vld [vmem:[%s8] sm:$0x3]
    %v374 = vlaneseq
    %v375 = vshrl.u32 %v374, 7
    %v376 = vsub.s32 0, %v375
    %v377 = vrot.slane %v372, %v376
    %v378 = vlaneseq
    %v379 = vshrl.u32 %v378, 7
    %v380 = vsub.s32 1, %v379
    %v381 = vrot.slane %v372, %v380
    %v416 = vunpack.c.l.b16 %v340
    %v417 = vunpack.c.h.b16 %v340
    %v418 = vunpack.c.l.b16 %v341
    %v419 = vunpack.c.h.b16 %v341
    %v420 = vunpack.c.l.b16 %v342
    %v421 = vunpack.c.h.b16 %v342
    %v422 = vunpack.c.l.b16 %v343
    %v423 = vunpack.c.h.b16 %v343
    %v424 = vunpack.c.l.b16 %v344
    %v425 = vunpack.c.h.b16 %v344
    %v426 = vunpack.c.l.b16 %v345
    %v427 = vunpack.c.h.b16 %v345
    %v428 = vunpack.c.l.b16 %v346
    %v429 = vunpack.c.h.b16 %v346
    %v430 = vunpack.c.l.b16 %v347
    %v431 = vunpack.c.h.b16 %v347
    %v432 = vunpack.c.l.b16 %v348
    %v433 = vunpack.c.h.b16 %v348
    %v434 = vunpack.c.l.b16 %v349
    %v435 = vunpack.c.h.b16 %v349
    %v436 = vunpack.c.l.b16 %v350
    %v437 = vunpack.c.h.b16 %v350
    %v438 = vunpack.c.l.b16 %v351
    %v439 = vunpack.c.h.b16 %v351
    %v440 = vunpack.c.l.b16 %v352
    %v441 = vunpack.c.h.b16 %v352
    %v442 = vunpack.c.l.b16 %v353
    %v443 = vunpack.c.h.b16 %v353
    %v444 = vunpack.c.l.b16 %v354
    %v445 = vunpack.c.h.b16 %v354
    %v446 = vunpack.c.l.b16 %v355
    %v447 = vunpack.c.h.b16 %v355
    %v448 = vunpack.c.l.b16 %v356
    %v449 = vunpack.c.h.b16 %v356
    %v450 = vunpack.c.l.b16 %v357
    %v451 = vunpack.c.h.b16 %v357
    %v452 = vunpack.c.l.b16 %v358
    %v453 = vunpack.c.h.b16 %v358
    %v454 = vunpack.c.l.b16 %v359
    %v455 = vunpack.c.h.b16 %v359
    %v456 = vunpack.c.l.b16 %v360
    %v457 = vunpack.c.h.b16 %v360
    %v458 = vunpack.c.l.b16 %v361
    %v459 = vunpack.c.h.b16 %v361
    %v460 = vunpack.c.l.b16 %v362
    %v461 = vunpack.c.h.b16 %v362
    %v462 = vunpack.c.l.b16 %v363
    %v463 = vunpack.c.h.b16 %v363
    %v464 = vunpack.c.l.b16 %v364
    %v465 = vunpack.c.h.b16 %v364
    %v466 = vunpack.c.l.b16 %v365
    %v467 = vunpack.c.h.b16 %v365
    %v468 = vunpack.c.l.b16 %v366
    %v469 = vunpack.c.h.b16 %v366
    %v470 = vunpack.c.l.b16 %v367
    %v471 = vunpack.c.h.b16 %v367
    %v472 = vunpack.c.l.b16 %v368
    %v473 = vunpack.c.h.b16 %v368
    %v474 = vunpack.c.l.b16 %v369
    %v475 = vunpack.c.h.b16 %v369
    %v476 = vunpack.c.l.b16 %v370
    %v477 = vunpack.c.h.b16 %v370
    %v478 = vunpack.c.l.b16 %v371
    %v479 = vunpack.c.h.b16 %v371
    %v480 = vpack.c.b16 %v418, %v416
    %v481 = vpack.c.b16 %v419, %v417
    %v482 = vpack.c.b16 %v422, %v420
    %v483 = vpack.c.b16 %v423, %v421
    %v484 = vpack.c.b16 %v426, %v424
    %v485 = vpack.c.b16 %v427, %v425
    %v486 = vpack.c.b16 %v430, %v428
    %v487 = vpack.c.b16 %v431, %v429
    %v488 = vpack.c.b16 %v434, %v432
    %v489 = vpack.c.b16 %v435, %v433
    %v490 = vpack.c.b16 %v438, %v436
    %v491 = vpack.c.b16 %v439, %v437
    %v492 = vpack.c.b16 %v442, %v440
    %v493 = vpack.c.b16 %v443, %v441
    %v494 = vpack.c.b16 %v446, %v444
    %v495 = vpack.c.b16 %v447, %v445
    %v496 = vpack.c.b16 %v450, %v448
    %v497 = vpack.c.b16 %v451, %v449
    %v498 = vpack.c.b16 %v454, %v452
    %v499 = vpack.c.b16 %v455, %v453
    %v500 = vpack.c.b16 %v458, %v456
    %v501 = vpack.c.b16 %v459, %v457
    %v502 = vpack.c.b16 %v462, %v460
    %v503 = vpack.c.b16 %v463, %v461
    %v504 = vpack.c.b16 %v466, %v464
    %v505 = vpack.c.b16 %v467, %v465
    %v506 = vpack.c.b16 %v470, %v468
    %v507 = vpack.c.b16 %v471, %v469
    %v508 = vpack.c.b16 %v474, %v472
    %v509 = vpack.c.b16 %v475, %v473
    %v510 = vpack.c.b16 %v478, %v476
    %v511 = vpack.c.b16 %v479, %v477
    %544 = vmatprep.subr.bf16.mxu0 %v481
    %545 = vmatpush1.bf16.msra.mxu0 %v480
    %546 = vmatprep.subr.bf16.mxu0 %v483
    %547 = vmatpush1.bf16.msra.mxu0 %v482
    %548 = vmatprep.subr.bf16.mxu0 %v485
    %549 = vmatpush1.bf16.msra.mxu0 %v484
    %550 = vmatprep.subr.bf16.mxu0 %v487
    %551 = vmatpush1.bf16.msra.mxu0 %v486
    %552 = vmatprep.subr.bf16.mxu0 %v489
    %553 = vmatpush1.bf16.msra.mxu0 %v488
    %554 = vmatprep.subr.bf16.mxu0 %v491
    %555 = vmatpush1.bf16.msra.mxu0 %v490
    %556 = vmatprep.subr.bf16.mxu0 %v493
    %557 = vmatpush1.bf16.msra.mxu0 %v492
    %558 = vmatprep.subr.bf16.mxu0 %v495
    %559 = vmatpush1.bf16.msra.mxu0 %v494
    %560 = vmatprep.subr.bf16.mxu0 %v497
    %561 = vmatpush1.bf16.msra.mxu0 %v496
    %562 = vmatprep.subr.bf16.mxu0 %v499
    %563 = vmatpush1.bf16.msra.mxu0 %v498
    %564 = vmatprep.subr.bf16.mxu0 %v501
    %565 = vmatpush1.bf16.msra.mxu0 %v500
    %566 = vmatprep.subr.bf16.mxu0 %v503
    %567 = vmatpush1.bf16.msra.mxu0 %v502
    %568 = vmatprep.subr.bf16.mxu0 %v505
    %569 = vmatpush1.bf16.msra.mxu0 %v504
    %570 = vmatprep.subr.bf16.mxu0 %v507
    %571 = vmatpush1.bf16.msra.mxu0 %v506
    %572 = vmatprep.subr.bf16.mxu0 %v509
    %573 = vmatpush1.bf16.msra.mxu0 %v508
    %574 = vmatprep.subr.bf16.mxu0 %v511
    %575 = vmatpush1.bf16.msra.mxu0 %v510
    %576 = vmatprep.mubr.bf16.mxu0 %v339
    %577 = vmatmul.mubr.bf16.gmra.mrb[0].mxu0 %v338
    %v578 = vpop.f32.mrb[0].mxu0
    %v579 = vadd.f32 %v377, %v578
    %v580 = vpop.f32.mrb[0].mxu0
    %v581 = vadd.f32 %v381, %v580
    %v582 = vpop.f32.mrb[0].mxu0
    %v583 = vadd.f32 %v377, %v582
    %v584 = vpop.f32.mrb[0].mxu0
    %v585 = vadd.f32 %v381, %v584
    %586 = vdwg.mxu0
    %v587 = vmax.f32 %v579, 0.0
    %v588 = vmax.f32 %v581, 0.0
    %v589 = vmax.f32 %v583, 0.0
    %v590 = vmax.f32 %v585, 0.0
    %v591 = vpack.c.bf16 %v589, %v587
    %v592 = vpack.c.bf16 %v590, %v588
    %v593 = vld [vmem:[%s9] sm:$0xf]
    %v594 = vld [vmem:[%s9 + $0x4] sm:$0xf]
    %v595 = vld [vmem:[%s9 + $0x8] sm:$0xf]
    %v596 = vld [vmem:[%s9 + $0xc] sm:$0xf]
    %v597 = vld [vmem:[%s9 + $0x10] sm:$0xf]
    %v598 = vld [vmem:[%s9 + $0x14] sm:$0xf]
    %v599 = vld [vmem:[%s9 + $0x18] sm:$0xf]
    %v600 = vld [vmem:[%s9 + $0x1c] sm:$0xf]
    %v601 = vld [vmem:[%s9 + $0x20] sm:$0xf]
    %v602 = vld [vmem:[%s9 + $0x24] sm:$0xf]
    %v603 = vld [vmem:[%s9 + $0x28] sm:$0xf]
    %v604 = vld [vmem:[%s9 + $0x2c] sm:$0xf]
    %v605 = vld [vmem:[%s9 + $0x30] sm:$0xf]
    %v606 = vld [vmem:[%s9 + $0x34] sm:$0xf]
    %v607 = vld [vmem:[%s9 + $0x38] sm:$0xf]
    %v608 = vld [vmem:[%s9 + $0x3c] sm:$0xf]
    %v609 = vld [vmem:[%s9 + $0x40] sm:$0xf]
    %v610 = vld [vmem:[%s9 + $0x44] sm:$0xf]
    %v611 = vld [vmem:[%s9 + $0x48] sm:$0xf]
    %v612 = vld [vmem:[%s9 + $0x4c] sm:$0xf]
    %v613 = vld [vmem:[%s9 + $0x50] sm:$0xf]
    %v614 = vld [vmem:[%s9 + $0x54] sm:$0xf]
    %v615 = vld [vmem:[%s9 + $0x58] sm:$0xf]
    %v616 = vld [vmem:[%s9 + $0x5c] sm:$0xf]
    %v617 = vld [vmem:[%s9 + $0x60] sm:$0xf]
    %v618 = vld [vmem:[%s9 + $0x64] sm:$0xf]
    %v619 = vld [vmem:[%s9 + $0x68] sm:$0xf]
    %v620 = vld [vmem:[%s9 + $0x6c] sm:$0xf]
    %v621 = vld [vmem:[%s9 + $0x70] sm:$0xf]
    %v622 = vld [vmem:[%s9 + $0x74] sm:$0xf]
    %v623 = vld [vmem:[%s9 + $0x78] sm:$0xf]
    %v624 = vld [vmem:[%s9 + $0x7c] sm:$0xf]
    %v625 = vld [vmem:[%s10] sm:$0x1]
    %v627 = vlaneseq
    %v628 = vshrl.u32 %v627, 7
    %v629 = vsub.s32 0, %v628
    %v630 = vrot.slane %v625, %v629
    %v664 = vunpack.c.l.b16 %v593
    %v665 = vunpack.c.l.b16 %v594
    %v666 = vunpack.c.l.b16 %v595
    %v667 = vunpack.c.l.b16 %v596
    %v668 = vunpack.c.l.b16 %v597
    %v669 = vunpack.c.l.b16 %v598
    %v670 = vunpack.c.l.b16 %v599
    %v671 = vunpack.c.l.b16 %v600
    %v672 = vunpack.c.l.b16 %v601
    %v673 = vunpack.c.l.b16 %v602
    %v674 = vunpack.c.l.b16 %v603
    %v675 = vunpack.c.l.b16 %v604
    %v676 = vunpack.c.l.b16 %v605
    %v677 = vunpack.c.l.b16 %v606
    %v678 = vunpack.c.l.b16 %v607
    %v679 = vunpack.c.l.b16 %v608
    %v680 = vunpack.c.l.b16 %v609
    %v681 = vunpack.c.l.b16 %v610
    %v682 = vunpack.c.l.b16 %v611
    %v683 = vunpack.c.l.b16 %v612
    %v684 = vunpack.c.l.b16 %v613
    %v685 = vunpack.c.l.b16 %v614
    %v686 = vunpack.c.l.b16 %v615
    %v687 = vunpack.c.l.b16 %v616
    %v688 = vunpack.c.l.b16 %v617
    %v689 = vunpack.c.l.b16 %v618
    %v690 = vunpack.c.l.b16 %v619
    %v691 = vunpack.c.l.b16 %v620
    %v692 = vunpack.c.l.b16 %v621
    %v693 = vunpack.c.l.b16 %v622
    %v694 = vunpack.c.l.b16 %v623
    %v695 = vunpack.c.l.b16 %v624
    %v696 = vpack.c.b16 %v665, %v664
    %v697 = vpack.c.b16 %v667, %v666
    %v698 = vpack.c.b16 %v669, %v668
    %v699 = vpack.c.b16 %v671, %v670
    %v700 = vpack.c.b16 %v673, %v672
    %v701 = vpack.c.b16 %v675, %v674
    %v702 = vpack.c.b16 %v677, %v676
    %v703 = vpack.c.b16 %v679, %v678
    %v704 = vpack.c.b16 %v681, %v680
    %v705 = vpack.c.b16 %v683, %v682
    %v706 = vpack.c.b16 %v685, %v684
    %v707 = vpack.c.b16 %v687, %v686
    %v708 = vpack.c.b16 %v689, %v688
    %v709 = vpack.c.b16 %v691, %v690
    %v710 = vpack.c.b16 %v693, %v692
    %v711 = vpack.c.b16 %v695, %v694
    %728 = vmatprep.subr.bf16.mxu0 0
    %729 = vmatpush1.bf16.msra.mxu0 %v696
    %730 = vmatprep.subr.bf16.mxu0 0
    %731 = vmatpush1.bf16.msra.mxu0 %v697
    %732 = vmatprep.subr.bf16.mxu0 0
    %733 = vmatpush1.bf16.msra.mxu0 %v698
    %734 = vmatprep.subr.bf16.mxu0 0
    %735 = vmatpush1.bf16.msra.mxu0 %v699
    %736 = vmatprep.subr.bf16.mxu0 0
    %737 = vmatpush1.bf16.msra.mxu0 %v700
    %738 = vmatprep.subr.bf16.mxu0 0
    %739 = vmatpush1.bf16.msra.mxu0 %v701
    %740 = vmatprep.subr.bf16.mxu0 0
    %741 = vmatpush1.bf16.msra.mxu0 %v702
    %742 = vmatprep.subr.bf16.mxu0 0
    %743 = vmatpush1.bf16.msra.mxu0 %v703
    %744 = vmatprep.subr.bf16.mxu0 0
    %745 = vmatpush1.bf16.msra.mxu0 %v704
    %746 = vmatprep.subr.bf16.mxu0 0
    %747 = vmatpush1.bf16.msra.mxu0 %v705
    %748 = vmatprep.subr.bf16.mxu0 0
    %749 = vmatpush1.bf16.msra.mxu0 %v706
    %750 = vmatprep.subr.bf16.mxu0 0
    %751 = vmatpush1.bf16.msra.mxu0 %v707
    %752 = vmatprep.subr.bf16.mxu0 0
    %753 = vmatpush1.bf16.msra.mxu0 %v708
    %754 = vmatprep.subr.bf16.mxu0 0
    %755 = vmatpush1.bf16.msra.mxu0 %v709
    %756 = vmatprep.subr.bf16.mxu0 0
    %757 = vmatpush1.bf16.msra.mxu0 %v710
    %758 = vmatprep.subr.bf16.mxu0 0
    %759 = vmatpush1.bf16.msra.mxu0 %v711
    %760 = vmatprep.mubr.bf16.mxu0 %v592
    %761 = vmatmul.mubr.bf16.gmra.mrb[0].mxu0 %v591
    %v762 = vpop.f32.mrb[0].mxu0
    %v763 = vadd.f32 %v630, %v762
    %v764 = vpop.f32.mrb[0].mxu0
    %v765 = vpop.f32.mrb[0].mxu0
    %v766 = vadd.f32 %v630, %v765
    %v767 = vpop.f32.mrb[0].mxu0
    %768 = vdwg.mxu0
    %v769 = vmax.f32 %v763, 0.0
    %v770 = vmax.f32 %v766, 0.0
    %v771 = vpack.c.bf16 %v770, %v769
    %v773 = vcombine.high %v771, %v771
    %v775 = vunpack.c.l.s4 1966171168
    %v776 = vunpack.c.0.s8 %v775
    %v777 = vlaneseq
    %v778 = vshrl.u32 %v777, 7
    %v779 = vsub.s32 %v776, %v778
    %v780 = vrot.slane %v771, %v779
    %v782 = vunpack.c.l.s4 1966171168
    %v783 = vunpack.c.0.s8 %v782
    %v784 = vlaneseq
    %v785 = vshrl.u32 %v784, 7
    %v786 = vsub.s32 %v783, %v785
    %v787 = vrot.slane %v773, %v786
    %v788 = vcombine.high %v780, %v780
    %v789 = vcombine.high %v787, %v787
    %v791 = vunpack.c.l.s4 1966171168
    %v792 = vunpack.c.0.s8 %v791
    %v793 = vlaneseq
    %v794 = vshrl.u32 %v793, 7
    %v795 = vsub.s32 %v792, %v794
    %v796 = vrot.slane %v780, %v795
    %v798 = vunpack.c.l.s4 1966171168
    %v799 = vunpack.c.0.s8 %v798
    %v800 = vlaneseq
    %v801 = vshrl.u32 %v800, 7
    %v802 = vsub.s32 %v799, %v801
    %v803 = vrot.slane %v787, %v802
    %v805 = vunpack.c.l.s4 1966171168
    %v806 = vunpack.c.0.s8 %v805
    %v807 = vlaneseq
    %v808 = vshrl.u32 %v807, 7
    %v809 = vsub.s32 %v806, %v808
    %v810 = vrot.slane %v788, %v809
    %v812 = vunpack.c.l.s4 1966171168
    %v813 = vunpack.c.0.s8 %v812
    %v814 = vlaneseq
    %v815 = vshrl.u32 %v814, 7
    %v816 = vsub.s32 %v813, %v815
    %v817 = vrot.slane %v789, %v816
    %v818 = vcombine.high %v796, %v796
    %v819 = vcombine.high %v803, %v803
    %v820 = vcombine.high %v810, %v810
    %v821 = vcombine.high %v817, %v817
    %vm830 = vcmask 122880
    %831 = vst.msk [vmem:[#allocation5] sm:$0x1] %vm830, %v796
    %832 = vst.msk [vmem:[#allocation5 + $0x1] sm:$0x1] %vm830, %v810
    %833 = vst.msk [vmem:[#allocation5 + $0x2] sm:$0x1] %vm830, %v818
    %834 = vst.msk [vmem:[#allocation5 + $0x3] sm:$0x1] %vm830, %v820
    %835 = vst.msk [vmem:[#allocation5 + $0x4] sm:$0x1] %vm830, %v803
    %836 = vst.msk [vmem:[#allocation5 + $0x5] sm:$0x1] %vm830, %v817
    %837 = vst.msk [vmem:[#allocation5 + $0x6] sm:$0x1] %vm830, %v819
    %838 = vst.msk [vmem:[#allocation5 + $0x7] sm:$0x1] %vm830, %v821
    // Predicated region
    $region50: #{tpu_custom_call.1} parent=1 // pred_check
      _
    $region51: #{tpu_custom_call.1} parent=1 // pred_check_branch
      %840 = sbr.rel (0) target = $region53
    $region52: #{tpu_custom_call.1} parent=1 // pred_region
      %s842 = ssub.s32 128, 16
      %843 = vsyncadd [#allocation4], %s842
      %s844 = sshll.u32 [#allocation5], 4
      %s845 = int_to_ptr.vmem [resolvable:$true] %s844
      %850 = dma.vmem_to_hbm [thread:$0]  %s845, 16, %s11, [#allocation4], 16, 16, 1
    $region53: #{tpu_custom_call.1} parent=1 // pred_fallthru
      _
    // Predicated region
    $region54: #{tpu_custom_call.1} parent=1 // pred_check
      _
    $region55: #{tpu_custom_call.1} parent=1 // pred_check_branch
      %852 = sbr.rel (0) target = $region57
    $region56: #{tpu_custom_call.1} parent=1 // pred_region
      %853 = dma.done [#allocation4], 128
    $region57: #{tpu_custom_call.1} parent=1 // pred_fallthru
      _
    %854 = vsyncpa [#allocation3], 1
    %855 = vsyncpa [#allocation4], 1

</llo_original>
